<compile_context>
chip_gen: v5e
topology: v5e:2x2
jax: 0.10.0
libtpu: 0.0.40
codegen_flags: <defaults>
</compile_context>

<pallas_src>
import math
import jax
import jax.numpy as jnp
from jax.experimental import pallas as pl
from jax.experimental.pallas import tpu as pltpu


def _round_up(x, m):
    return ((x + m - 1) // m) * m


def _pad2(x, rows, cols):
    pr, pc = rows - x.shape[0], cols - x.shape[1]
    if pr == 0 and pc == 0:
        return x
    return jnp.pad(x, ((0, pr), (0, pc)))


def _train_kernel(state_ref, wmu_ref, wsig_ref, weps_ref,
                  bmu_ref, bsig_ref, beps_ref, out_ref, acc_ref):
    k = pl.program_id(2)

    @pl.when(k == 0)
    def _():
        acc_ref[...] = jnp.zeros_like(acc_ref)

    # Noisy-weight assembly on the VPU (f32), matmul on the MXU (f32 accum).
    weight = wmu_ref[...] + wsig_ref[...] * weps_ref[...]          # (tk, tn)
    acc_ref[...] += jnp.dot(state_ref[...], weight,
                            preferred_element_type=jnp.float32)

    @pl.when(k == pl.num_programs(2) - 1)
    def _():
        bias = bmu_ref[...] + bsig_ref[...] * beps_ref[...]        # (1, tn)
        out_ref[...] = (acc_ref[...] + bias).astype(out_ref.dtype)


def _eval_kernel(state_ref, wmu_ref, bmu_ref, out_ref, acc_ref):
    k = pl.program_id(2)

    @pl.when(k == 0)
    def _():
        acc_ref[...] = jnp.zeros_like(acc_ref)

    acc_ref[...] += jnp.dot(state_ref[...], wmu_ref[...],
                            preferred_element_type=jnp.float32)

    @pl.when(k == pl.num_programs(2) - 1)
    def _():
        out_ref[...] = (acc_ref[...] + bmu_ref[...]).astype(out_ref.dtype)


def noised_linear(state, w_mu, w_sigma, w_eps, b_mu, b_sigma, b_eps,
                  *, training=True, tm=256, tn=256, tk=512):
    """Pallas NoisedLinear forward.

    state:  (B, in_features) f32
    w_*:    (in_features, out_features) f32
    b_*:    (out_features, 1) f32  (PyTorch NoisedMatrix(out, 1) layout)
    """
    B, in_f = state.shape
    out_f = w_mu.shape[1]

    # Clamp tiles to the (padded) problem dims, keep (8, 128) alignment.
    tm = max(8,   min(tm, _round_up(B, 8)))
    tn = max(128, min(tn, _round_up(out_f, 128)))
    tk = max(128, min(tk, _round_up(in_f, 128)))

    Mp, Np, Kp = _round_up(B, tm), _round_up(out_f, tn), _round_up(in_f, tk)
    grid = (Mp // tm, Np // tn, Kp // tk)

    state_p = _pad2(state, Mp, Kp)
    # (out, 1) -> (1, out) so the bias is lane-dense and broadcasts over batch.
    b_mu_r = _pad2(b_mu.reshape(1, out_f), 1, Np)

    state_spec = pl.BlockSpec((tm, tk), lambda i, j, k: (i, k))
    w_spec = pl.BlockSpec((tk, tn), lambda i, j, k: (k, j))
    b_spec = pl.BlockSpec((1, tn), lambda i, j, k: (0, j))
    out_spec = pl.BlockSpec((tm, tn), lambda i, j, k: (i, j))

    if training:
        inputs = (state_p,
                  _pad2(w_mu, Kp, Np), _pad2(w_sigma, Kp, Np),
                  _pad2(w_eps, Kp, Np),
                  b_mu_r,
                  _pad2(b_sigma.reshape(1, out_f), 1, Np),
                  _pad2(b_eps.reshape(1, out_f), 1, Np))
        in_specs = [state_spec, w_spec, w_spec, w_spec, b_spec, b_spec, b_spec]
        kernel = _train_kernel
        n_w, n_b = 3, 3
    else:
        # Eval path: mu only -- no zero-epsilon arrays, no sigma/eps streams.
        inputs = (state_p, _pad2(w_mu, Kp, Np), b_mu_r)
        in_specs = [state_spec, w_spec, b_spec]
        kernel = _eval_kernel
        n_w, n_b = 1, 1

    # VMEM budget: double-buffered in/out tiles + f32 accumulator + assembled
    # weight temp + headroom; capped at 64 MiB so the same tiling fits v7x.
    elems = (2 * (tm * tk + n_w * tk * tn + n_b * tn + tm * tn)
             + tm * tn + tk * tn)
    vmem_limit = int(min(max(4 * elems + (8 << 20), 32 << 20), 64 << 20))

    out_p = pl.pallas_call(
        kernel,
        out_shape=jax.ShapeDtypeStruct((Mp, Np), jnp.float32),
        grid_spec=pltpu.PrefetchScalarGridSpec(
            num_scalar_prefetch=0,
            grid=grid,
            in_specs=in_specs,
            out_specs=out_spec,
            scratch_shapes=[pltpu.VMEM((tm, tn), jnp.float32)],
        ),
        compiler_params=pltpu.CompilerParams(
            dimension_semantics=("parallel", "parallel", "arbitrary"),
            vmem_limit_bytes=vmem_limit,
        ),
    )(*inputs)

    return out_p[:B, :out_f]


def init_noised_linear_params(key, in_features, out_features, sigma_init=0.017):
    """Deterministic parameter init mirroring NoisedMatrix.init_weights."""
    k_w, k_b = jax.random.split(key)
    init_range_w = math.sqrt(3.0 / in_features)
    init_range_b = math.sqrt(3.0 / out_features)
    w_mu = jax.random.uniform(k_w, (in_features, out_features),
                              minval=-init_range_w, maxval=init_range_w,
                              dtype=jnp.float32)
    w_sigma = jnp.full((in_features, out_features), sigma_init, jnp.float32)
    b_mu = jax.random.uniform(k_b, (out_features, 1),
                              minval=-init_range_b, maxval=init_range_b,
                              dtype=jnp.float32)
    b_sigma = jnp.full((out_features, 1), sigma_init, jnp.float32)
    return w_mu, w_sigma, b_mu, b_sigma


def _reference(state, w_mu, w_sigma, w_eps, b_mu, b_sigma, b_eps, training):
    if training:
        weight = w_mu + w_sigma * w_eps
        bias = (b_mu + b_sigma * b_eps).squeeze()
    else:
        weight = w_mu
        bias = b_mu.squeeze()
    return state @ weight + bias


if __name__ == "__main__":
    key = jax.random.PRNGKey(0)

    # --- test 1: tiny shapes matching the module's toy usage -------------
    k_params, k_state, k_eps_w, k_eps_b, key = jax.random.split(key, 5)
    B, in_features, out_features = 8, 32, 16

    w_mu, w_sigma, b_mu, b_sigma = init_noised_linear_params(
        k_params, in_features, out_features)
    w_eps = jax.random.normal(k_eps_w, (in_features, out_features), jnp.float32)
    b_eps = jax.random.normal(k_eps_b, (out_features, 1), jnp.float32)
    state = jax.random.normal(k_state, (B, in_features), jnp.float32)

    qs = noised_linear(state, w_mu, w_sigma, w_eps, b_mu, b_sigma, b_eps,
                       training=True)
    jax.block_until_ready(qs)
    qs_ref = _reference(state, w_mu, w_sigma, w_eps, b_mu, b_sigma, b_eps, True)
    assert qs.shape == (B, out_features)
    assert jnp.allclose(qs, qs_ref, atol=1e-5, rtol=1e-5)

    qs_eval = noised_linear(state, w_mu, w_sigma, w_eps, b_mu, b_sigma, b_eps,
                            training=False)
    jax.block_until_ready(qs_eval)
    qs_eval_ref = _reference(state, w_mu, w_sigma, w_eps, b_mu, b_sigma, b_eps,
                             False)
    assert jnp.allclose(qs_eval, qs_eval_ref, atol=1e-5, rtol=1e-5)

    # --- test 2: multi-tile grid (exercises K accumulation + finalize) ----
    k_params2, k_state2, k_eps_w2, k_eps_b2, key = jax.random.split(key, 5)
    B2, in2, out2 = 16, 384, 256
    w_mu2, w_sigma2, b_mu2, b_sigma2 = init_noised_linear_params(
        k_params2, in2, out2)
    w_eps2 = jax.random.normal(k_eps_w2, (in2, out2), jnp.float32)
    b_eps2 = jax.random.normal(k_eps_b2, (out2, 1), jnp.float32)
    state2 = jax.random.normal(k_state2, (B2, in2), jnp.float32)

    qs2 = noised_linear(state2, w_mu2, w_sigma2, w_eps2, b_mu2, b_sigma2,
                        b_eps2, training=True, tm=8, tn=128, tk=128)
    jax.block_until_ready(qs2)
    qs2_ref = _reference(state2, w_mu2, w_sigma2, w_eps2, b_mu2, b_sigma2,
                         b_eps2, True)
    assert qs2.shape == (B2, out2)
    assert jnp.allclose(qs2, qs2_ref, atol=1e-4, rtol=1e-4)

    print("KERNEL_OK")
</pallas_src>

<mosaic_0001>
module attributes {stable_mosaic.version = 11 : i64} {
  func.func @_train_kernel(%arg0: i32, %arg1: i32, %arg2: i32, %arg3: memref<8x128xf32, #tpu.memory_space<vmem>>, %arg4: memref<128x128xf32, #tpu.memory_space<vmem>>, %arg5: memref<128x128xf32, #tpu.memory_space<vmem>>, %arg6: memref<128x128xf32, #tpu.memory_space<vmem>>, %arg7: memref<1x128xf32, #tpu.memory_space<vmem>>, %arg8: memref<1x128xf32, #tpu.memory_space<vmem>>, %arg9: memref<1x128xf32, #tpu.memory_space<vmem>>, %arg10: memref<8x128xf32, #tpu.memory_space<vmem>>, %arg11: memref<8x128xf32, #tpu.memory_space<vmem>>) attributes {dimension_semantics = [#tpu.dimension_semantics<parallel>, #tpu.dimension_semantics<parallel>, #tpu.dimension_semantics<arbitrary>], iteration_bounds = array<i64: 1, 1, 1>, scalar_prefetch = 0 : i64, scratch_operands = 1 : i64, tpu.core_type = #tpu.core_type<tc>, window_params = [{transform_indices = @transform_0, window_bounds = array<i64: 8, 128>}, {transform_indices = @transform_1, window_bounds = array<i64: 128, 128>}, {transform_indices = @transform_2, window_bounds = array<i64: 128, 128>}, {transform_indices = @transform_3, window_bounds = array<i64: 128, 128>}, {transform_indices = @transform_4, window_bounds = array<i64: 1, 128>}, {transform_indices = @transform_5, window_bounds = array<i64: 1, 128>}, {transform_indices = @transform_6, window_bounds = array<i64: 1, 128>}, {transform_indices = @transform_7, window_bounds = array<i64: 8, 128>}]} {
    %c0_i32 = arith.constant 0 : i32
    %0 = arith.cmpi eq, %arg2, %c0_i32 : i32
    %1 = arith.extui %0 : i1 to i32
    %c0_i32_0 = arith.constant 0 : i32
    %2 = arith.cmpi ne, %1, %c0_i32_0 : i32
    scf.if %2 {
      %cst_14 = arith.constant 0.000000e+00 : f32
      %16 = vector.broadcast %cst_14 : f32 to vector<8x128xf32>
      %c0_15 = arith.constant 0 : index
      %c0_16 = arith.constant 0 : index
      %17 = vector.load %arg11[%c0_15, %c0_16] : memref<8x128xf32, #tpu.memory_space<vmem>>, vector<8x128xf32>
      tpu.vector_store %arg11[%c0_15, %c0_16], %16 {strides = array<i32>} : memref<8x128xf32, #tpu.memory_space<vmem>>, vector<8x128xf32>,
    } else {
    }
    %c0 = arith.constant 0 : index
    %c0_1 = arith.constant 0 : index
    %3 = vector.load %arg4[%c0, %c0_1] : memref<128x128xf32, #tpu.memory_space<vmem>>, vector<128x128xf32>
    %c0_2 = arith.constant 0 : index
    %c0_3 = arith.constant 0 : index
    %4 = vector.load %arg5[%c0_2, %c0_3] : memref<128x128xf32, #tpu.memory_space<vmem>>, vector<128x128xf32>
    %c0_4 = arith.constant 0 : index
    %c0_5 = arith.constant 0 : index
    %5 = vector.load %arg6[%c0_4, %c0_5] : memref<128x128xf32, #tpu.memory_space<vmem>>, vector<128x128xf32>
    %6 = arith.mulf %4, %5 : vector<128x128xf32>
    %7 = arith.addf %3, %6 : vector<128x128xf32>
    %c0_6 = arith.constant 0 : index
    %c0_7 = arith.constant 0 : index
    %8 = vector.load %arg11[%c0_6, %c0_7] : memref<8x128xf32, #tpu.memory_space<vmem>>, vector<8x128xf32>
    %c0_8 = arith.constant 0 : index
    %c0_9 = arith.constant 0 : index
    %9 = vector.load %arg3[%c0_8, %c0_9] : memref<8x128xf32, #tpu.memory_space<vmem>>, vector<8x128xf32>
    %cst = arith.constant dense<0.000000e+00> : vector<8x128xf32>
    %10 = tpu.matmul %9, %7, %cst {dimension_numbers = #tpu.dot_dimension_numbers<[1], [0], [0], [1], [0, 0, 1, 1], [], []>} : vector<8x128xf32>, vector<128x128xf32>, vector<8x128xf32> -> vector<8x128xf32>
    %11 = arith.addf %8, %10 : vector<8x128xf32>
    %c0_10 = arith.constant 0 : index
    %c0_11 = arith.constant 0 : index
    %12 = vector.load %arg11[%c0_10, %c0_11] : memref<8x128xf32, #tpu.memory_space<vmem>>, vector<8x128xf32>
    tpu.vector_store %arg11[%c0_10, %c0_11], %11 {strides = array<i32>} : memref<8x128xf32, #tpu.memory_space<vmem>>, vector<8x128xf32>,
    %c0_i32_12 = arith.constant 0 : i32
    %13 = arith.cmpi eq, %arg2, %c0_i32_12 : i32
    %14 = arith.extui %13 : i1 to i32
    %c0_i32_13 = arith.constant 0 : i32
    %15 = arith.cmpi ne, %14, %c0_i32_13 : i32
    scf.if %15 {
      %c0_14 = arith.constant 0 : index
      %c0_15 = arith.constant 0 : index
      %16 = vector.load %arg7[%c0_14, %c0_15] : memref<1x128xf32, #tpu.memory_space<vmem>>, vector<1x128xf32>
      %c0_16 = arith.constant 0 : index
      %c0_17 = arith.constant 0 : index
      %17 = vector.load %arg8[%c0_16, %c0_17] : memref<1x128xf32, #tpu.memory_space<vmem>>, vector<1x128xf32>
      %c0_18 = arith.constant 0 : index
      %c0_19 = arith.constant 0 : index
      %18 = vector.load %arg9[%c0_18, %c0_19] : memref<1x128xf32, #tpu.memory_space<vmem>>, vector<1x128xf32>
      %19 = arith.mulf %17, %18 : vector<1x128xf32>
      %20 = arith.addf %16, %19 : vector<1x128xf32>
      %c0_20 = arith.constant 0 : index
      %c0_21 = arith.constant 0 : index
      %21 = vector.load %arg11[%c0_20, %c0_21] : memref<8x128xf32, #tpu.memory_space<vmem>>, vector<8x128xf32>
      %22 = vector.broadcast %20 : vector<1x128xf32> to vector<8x128xf32>
      %23 = arith.addf %21, %22 : vector<8x128xf32>
      %c0_22 = arith.constant 0 : index
      %c0_23 = arith.constant 0 : index
      %24 = vector.load %arg10[%c0_22, %c0_23] : memref<8x128xf32, #tpu.memory_space<vmem>>, vector<8x128xf32>
      tpu.vector_store %arg10[%c0_22, %c0_23], %23 {strides = array<i32>} : memref<8x128xf32, #tpu.memory_space<vmem>>, vector<8x128xf32>,
    } else {
    }
    return
  }
  func.func @transform_0(%arg0: i32, %arg1: i32, %arg2: i32) -> (i32, i32) {
    %c0_i32 = arith.constant 0 : i32
    return %arg0, %arg2 : i32, i32
  }
  func.func @transform_1(%arg0: i32, %arg1: i32, %arg2: i32) -> (i32, i32) {
    %c0_i32 = arith.constant 0 : i32
    return %arg2, %arg1 : i32, i32
  }
  func.func @transform_2(%arg0: i32, %arg1: i32, %arg2: i32) -> (i32, i32) {
    %c0_i32 = arith.constant 0 : i32
    return %arg2, %arg1 : i32, i32
  }
  func.func @transform_3(%arg0: i32, %arg1: i32, %arg2: i32) -> (i32, i32) {
    %c0_i32 = arith.constant 0 : i32
    return %arg2, %arg1 : i32, i32
  }
  func.func @transform_4(%arg0: i32, %arg1: i32, %arg2: i32) -> (i32, i32) {
    %c0_i32 = arith.constant 0 : i32
    %c0_i32_0 = arith.constant 0 : i32
    return %c0_i32, %arg1 : i32, i32
  }
  func.func @transform_5(%arg0: i32, %arg1: i32, %arg2: i32) -> (i32, i32) {
    %c0_i32 = arith.constant 0 : i32
    %c0_i32_0 = arith.constant 0 : i32
    return %c0_i32, %arg1 : i32, i32
  }
  func.func @transform_6(%arg0: i32, %arg1: i32, %arg2: i32) -> (i32, i32) {
    %c0_i32 = arith.constant 0 : i32
    %c0_i32_0 = arith.constant 0 : i32
    return %c0_i32, %arg1 : i32, i32
  }
  func.func @transform_7(%arg0: i32, %arg1: i32, %arg2: i32) -> (i32, i32) {
    %c0_i32 = arith.constant 0 : i32
    return %arg0, %arg1 : i32, i32
  }
}

</mosaic_0001>

<llo_original>
// kernel: tpu_custom_call.1
$region0: #{tpu_custom_call.1}
  #allocation0 [shape = 'u32[]', space=smem, size = 0x4, offset = 0x4, fixed_abs, tag = 'smem constant byte address 0x4 - core index']
  #allocation1 [shape = 'u32[72,128]{1,0:T(1,128)}', space=vmem, size = 0x9000, scoped, tag = 'internal scratch']
  #allocation2 [shape = 'f32[8,128]{1,0:T(8,128)}', space=vmem, size = 0x1000, scoped, tag = 'scratch operand']
  %s0 = inlined_call_operand.hbm [shape: f32[8,128], index: 0, kind: input, shape index: {}]
  %s1 = inlined_call_operand.hbm [shape: f32[128,128], index: 1, kind: input, shape index: {}]
  %s2 = inlined_call_operand.hbm [shape: f32[128,128], index: 2, kind: input, shape index: {}]
  %s3 = inlined_call_operand.hbm [shape: f32[128,128], index: 3, kind: input, shape index: {}]
  %s4 = inlined_call_operand.vmem [shape: f32[1,128], index: 4, kind: input, shape index: {}]
  %s5 = inlined_call_operand.vmem [shape: f32[1,128], index: 5, kind: input, shape index: {}]
  %s6 = inlined_call_operand.vmem [shape: f32[1,128], index: 6, kind: input, shape index: {}]
  %s7 = inlined_call_operand.hbm [shape: f32[8,128], index: 7, kind: output, shape index: {}]
  %s8 = sld [smem:[#allocation0]]
  $region62: #{tpu_custom_call.1} parent=0
    _
  %s10 = ssub.s32 1, %s8
  %s11 = scalar_select 0, %s10, %s8
  $region1: #{tpu_custom_call.1} parent=0
    #allocation3 [shape = 'u8[4096]{0}', space=vmem, size = 0x1000, scoped, tag = 'input window, operand 0, single buffered']
    #allocation4 [shape = 's32[1]{0}', space=sflag, size = 0x4, scoped, tag = 'scoped memory for tpu_custom_call.1']
    #allocation5 [shape = 's32[1]{0}', space=sflag, size = 0x4, scoped, tag = 'scoped memory for tpu_custom_call.1']
    #allocation6 [shape = 'u8[65536]{0}', space=vmem, size = 0x10000, scoped, tag = 'input window, operand 1, single buffered']
    #allocation7 [shape = 's32[1]{0}', space=sflag, size = 0x4, scoped, tag = 'scoped memory for tpu_custom_call.1']
    #allocation8 [shape = 'u8[65536]{0}', space=vmem, size = 0x10000, scoped, tag = 'input window, operand 2, single buffered']
    #allocation9 [shape = 'u8[65536]{0}', space=vmem, size = 0x10000, scoped, tag = 'input window, operand 3, single buffered']
    #allocation10 [shape = 's32[1]{0}', space=sflag, size = 0x4, scoped, tag = 'scoped memory for tpu_custom_call.1']
    #allocation11 [shape = 'u8[4096]{0}', space=vmem, size = 0x1000, scoped, tag = 'output window, operand 0, single buffered']
    %12 = vsyncpa [#allocation4], 0
    %13 = vsyncpa [#allocation7], 0
    %14 = vsyncpa [#allocation10], 0
    %15 = vsyncpa [#allocation5], 0
    // Predicated region
    $region2: #{tpu_custom_call.1} parent=1 // pred_check
      _
    $region3: #{tpu_custom_call.1} parent=1 // pred_check_branch
      %17 = sbr.rel (0) target = $region5
    $region4: #{tpu_custom_call.1} parent=1 // pred_region
      %19 = vsyncadd [#allocation4], 0
      %s21 = sshll.u32 %s0, 4
      %s22 = int_to_ptr.hbm [resolvable:$true] %s21
      %s23 = sshll.u32 [#allocation3], 4
      %s24 = int_to_ptr.vmem [resolvable:$true] %s23
      %26 = dma.hbm_to_vmem [thread:$0]  %s22, 128, %s24, [#allocation4]
    $region5: #{tpu_custom_call.1} parent=1 // pred_fallthru
      _
    // Predicated region
    $region6: #{tpu_custom_call.1} parent=1 // pred_check
      _
    $region7: #{tpu_custom_call.1} parent=1 // pred_check_branch
      %28 = sbr.rel (0) target = $region9
    $region8: #{tpu_custom_call.1} parent=1 // pred_region
      %30 = vsyncadd [#allocation7], 0
      %s31 = sshll.u32 %s1, 4
      %s32 = int_to_ptr.hbm [resolvable:$true] %s31
      %s33 = sshll.u32 [#allocation6], 4
      %s34 = int_to_ptr.vmem [resolvable:$true] %s33
      %39 = dma.hbm_to_vmem [thread:$0]  %s32, 2048, %s34, [#allocation7], 128, 128, 8
    $region9: #{tpu_custom_call.1} parent=1 // pred_fallthru
      _
    // Predicated region
    $region10: #{tpu_custom_call.1} parent=1 // pred_check
      _
    $region11: #{tpu_custom_call.1} parent=1 // pred_check_branch
      %41 = sbr.rel (0) target = $region13
    $region12: #{tpu_custom_call.1} parent=1 // pred_region
      %43 = vsyncadd [#allocation7], 0
      %s44 = sshll.u32 %s2, 4
      %s45 = int_to_ptr.hbm [resolvable:$true] %s44
      %s46 = sshll.u32 [#allocation8], 4
      %s47 = int_to_ptr.vmem [resolvable:$true] %s46
      %52 = dma.hbm_to_vmem [thread:$0]  %s45, 2048, %s47, [#allocation7], 128, 128, 8
    $region13: #{tpu_custom_call.1} parent=1 // pred_fallthru
      _
    // Predicated region
    $region14: #{tpu_custom_call.1} parent=1 // pred_check
      _
    $region15: #{tpu_custom_call.1} parent=1 // pred_check_branch
      %54 = sbr.rel (0) target = $region17
    $region16: #{tpu_custom_call.1} parent=1 // pred_region
      %56 = vsyncadd [#allocation10], 0
      %s57 = sshll.u32 %s3, 4
      %s58 = int_to_ptr.hbm [resolvable:$true] %s57
      %s59 = sshll.u32 [#allocation9], 4
      %s60 = int_to_ptr.vmem [resolvable:$true] %s59
      %65 = dma.hbm_to_vmem [thread:$0]  %s58, 2048, %s60, [#allocation10], 128, 128, 8
    $region17: #{tpu_custom_call.1} parent=1 // pred_fallthru
      _
    // Predicated region
    $region18: #{tpu_custom_call.1} parent=1 // pred_check
      _
    $region19: #{tpu_custom_call.1} parent=1 // pred_check_branch
      %67 = sbr.rel (0) target = $region21
    $region20: #{tpu_custom_call.1} parent=1 // pred_region
      _
    $region21: #{tpu_custom_call.1} parent=1 // pred_fallthru
      _
    // Predicated region
    $region22: #{tpu_custom_call.1} parent=1 // pred_check
      _
    $region23: #{tpu_custom_call.1} parent=1 // pred_check_branch
      %69 = sbr.rel (0) target = $region25
    $region24: #{tpu_custom_call.1} parent=1 // pred_region
      _
    $region25: #{tpu_custom_call.1} parent=1 // pred_fallthru
      _
    // Predicated region
    $region26: #{tpu_custom_call.1} parent=1 // pred_check
      _
    $region27: #{tpu_custom_call.1} parent=1 // pred_check_branch
      %71 = sbr.rel (0) target = $region29
    $region28: #{tpu_custom_call.1} parent=1 // pred_region
      _
    $region29: #{tpu_custom_call.1} parent=1 // pred_fallthru
      _
    // Predicated region
    $region30: #{tpu_custom_call.1} parent=1 // pred_check
      _
    $region31: #{tpu_custom_call.1} parent=1 // pred_check_branch
      %73 = sbr.rel (0) target = $region33
    $region32: #{tpu_custom_call.1} parent=1 // pred_region
      %75 = dma.done [#allocation4], 128
    $region33: #{tpu_custom_call.1} parent=1 // pred_fallthru
      _
    // Predicated region
    $region34: #{tpu_custom_call.1} parent=1 // pred_check
      _
    $region35: #{tpu_custom_call.1} parent=1 // pred_check_branch
      %77 = sbr.rel (0) target = $region37
    $region36: #{tpu_custom_call.1} parent=1 // pred_region
      %79 = dma.done [#allocation7], 2048
    $region37: #{tpu_custom_call.1} parent=1 // pred_fallthru
      _
    // Predicated region
    $region38: #{tpu_custom_call.1} parent=1 // pred_check
      _
    $region39: #{tpu_custom_call.1} parent=1 // pred_check_branch
      %81 = sbr.rel (0) target = $region41
    $region40: #{tpu_custom_call.1} parent=1 // pred_region
      %83 = dma.done [#allocation7], 2048
    $region41: #{tpu_custom_call.1} parent=1 // pred_fallthru
      _
    // Predicated region
    $region42: #{tpu_custom_call.1} parent=1 // pred_check
      _
    $region43: #{tpu_custom_call.1} parent=1 // pred_check_branch
      %85 = sbr.rel (0) target = $region45
    $region44: #{tpu_custom_call.1} parent=1 // pred_region
      %87 = dma.done [#allocation10], 2048
    $region45: #{tpu_custom_call.1} parent=1 // pred_fallthru
      _
    %p88 = scmp.eq.s32.totalorder 0, 0
    // Predicated region
    $region46: #{tpu_custom_call.1} parent=1 // pred_check
      %p89 = pneg %p88
    $region47: #{tpu_custom_call.1} parent=1 // pred_check_branch
      %91 = sbr.rel (%p89) target = $region49
    $region48: #{tpu_custom_call.1} parent=1 // pred_region
      %92 = vst [vmem:[#allocation2] sm:$0xff] 0.0
    $region49: #{tpu_custom_call.1} parent=1 // pred_fallthru
      _
    %v93 = vld [vmem:[#allocation6] sm:$0xff]
    %v94 = vld [vmem:[#allocation6 + $0x8] sm:$0xff]
    %v95 = vld [vmem:[#allocation6 + $0x10] sm:$0xff]
    %v96 = vld [vmem:[#allocation6 + $0x18] sm:$0xff]
    %v97 = vld [vmem:[#allocation6 + $0x20] sm:$0xff]
    %v98 = vld [vmem:[#allocation6 + $0x28] sm:$0xff]
    %v99 = vld [vmem:[#allocation6 + $0x30] sm:$0xff]
    %v100 = vld [vmem:[#allocation6 + $0x38] sm:$0xff]
    %v101 = vld [vmem:[#allocation6 + $0x40] sm:$0xff]
    %v102 = vld [vmem:[#allocation6 + $0x48] sm:$0xff]
    %v103 = vld [vmem:[#allocation6 + $0x50] sm:$0xff]
    %v104 = vld [vmem:[#allocation6 + $0x58] sm:$0xff]
    %v105 = vld [vmem:[#allocation6 + $0x60] sm:$0xff]
    %v106 = vld [vmem:[#allocation6 + $0x68] sm:$0xff]
    %v107 = vld [vmem:[#allocation6 + $0x70] sm:$0xff]
    %v108 = vld [vmem:[#allocation6 + $0x78] sm:$0xff]
    %v109 = vld [vmem:[#allocation8] sm:$0xff]
    %v110 = vld [vmem:[#allocation8 + $0x8] sm:$0xff]
    %v111 = vld [vmem:[#allocation8 + $0x10] sm:$0xff]
    %v112 = vld [vmem:[#allocation8 + $0x18] sm:$0xff]
    %v113 = vld [vmem:[#allocation8 + $0x20] sm:$0xff]
    %v114 = vld [vmem:[#allocation8 + $0x28] sm:$0xff]
    %v115 = vld [vmem:[#allocation8 + $0x30] sm:$0xff]
    %v116 = vld [vmem:[#allocation8 + $0x38] sm:$0xff]
    %v117 = vld [vmem:[#allocation8 + $0x40] sm:$0xff]
    %v118 = vld [vmem:[#allocation8 + $0x48] sm:$0xff]
    %v119 = vld [vmem:[#allocation8 + $0x50] sm:$0xff]
    %v120 = vld [vmem:[#allocation8 + $0x58] sm:$0xff]
    %v121 = vld [vmem:[#allocation8 + $0x60] sm:$0xff]
    %v122 = vld [vmem:[#allocation8 + $0x68] sm:$0xff]
    %v123 = vld [vmem:[#allocation8 + $0x70] sm:$0xff]
    %v124 = vld [vmem:[#allocation8 + $0x78] sm:$0xff]
    %v125 = vld [vmem:[#allocation9] sm:$0xff]
    %v126 = vld [vmem:[#allocation9 + $0x8] sm:$0xff]
    %v127 = vld [vmem:[#allocation9 + $0x10] sm:$0xff]
    %v128 = vld [vmem:[#allocation9 + $0x18] sm:$0xff]
    %v129 = vld [vmem:[#allocation9 + $0x20] sm:$0xff]
    %v130 = vld [vmem:[#allocation9 + $0x28] sm:$0xff]
    %v131 = vld [vmem:[#allocation9 + $0x30] sm:$0xff]
    %v132 = vld [vmem:[#allocation9 + $0x38] sm:$0xff]
    %v133 = vld [vmem:[#allocation9 + $0x40] sm:$0xff]
    %v134 = vld [vmem:[#allocation9 + $0x48] sm:$0xff]
    %v135 = vld [vmem:[#allocation9 + $0x50] sm:$0xff]
    %v136 = vld [vmem:[#allocation9 + $0x58] sm:$0xff]
    %v137 = vld [vmem:[#allocation9 + $0x60] sm:$0xff]
    %v138 = vld [vmem:[#allocation9 + $0x68] sm:$0xff]
    %v139 = vld [vmem:[#allocation9 + $0x70] sm:$0xff]
    %v140 = vld [vmem:[#allocation9 + $0x78] sm:$0xff]
    %v141 = vmul.f32 %v109, %v125
    %v142 = vmul.f32 %v110, %v126
    %v143 = vmul.f32 %v111, %v127
    %v144 = vmul.f32 %v112, %v128
    %v145 = vmul.f32 %v113, %v129
    %v146 = vmul.f32 %v114, %v130
    %v147 = vmul.f32 %v115, %v131
    %v148 = vmul.f32 %v116, %v132
    %v149 = vmul.f32 %v117, %v133
    %v150 = vmul.f32 %v118, %v134
    %v151 = vmul.f32 %v119, %v135
    %v152 = vmul.f32 %v120, %v136
    %v153 = vmul.f32 %v121, %v137
    %v154 = vmul.f32 %v122, %v138
    %v155 = vmul.f32 %v123, %v139
    %v156 = vmul.f32 %v124, %v140
    %v157 = vadd.f32 %v93, %v141
    %v158 = vadd.f32 %v94, %v142
    %v159 = vadd.f32 %v95, %v143
    %v160 = vadd.f32 %v96, %v144
    %v161 = vadd.f32 %v97, %v145
    %v162 = vadd.f32 %v98, %v146
    %v163 = vadd.f32 %v99, %v147
    %v164 = vadd.f32 %v100, %v148
    %v165 = vadd.f32 %v101, %v149
    %v166 = vadd.f32 %v102, %v150
    %v167 = vadd.f32 %v103, %v151
    %v168 = vadd.f32 %v104, %v152
    %v169 = vadd.f32 %v105, %v153
    %v170 = vadd.f32 %v106, %v154
    %v171 = vadd.f32 %v107, %v155
    %v172 = vadd.f32 %v108, %v156
    %v173 = vld [vmem:[#allocation2] sm:$0xff]
    %v174 = vld [vmem:[#allocation3] sm:$0xff]
    %175 = vmatpush.msra.mxu0 %v172
    %176 = vmatpush.msra.mxu0 %v171
    %177 = vmatpush.msra.mxu0 %v170
    %178 = vmatpush.msra.mxu0 %v169
    %179 = vmatpush.msra.mxu0 %v168
    %180 = vmatpush.msra.mxu0 %v167
    %181 = vmatpush.msra.mxu0 %v166
    %182 = vmatpush.msra.mxu0 %v165
    %183 = vmatpush.msra.mxu0 %v164
    %184 = vmatpush.msra.mxu0 %v163
    %185 = vmatpush.msra.mxu0 %v162
    %186 = vmatpush.msra.mxu0 %v161
    %187 = vmatpush.msra.mxu0 %v160
    %188 = vmatpush.msra.mxu0 %v159
    %189 = vmatpush.msra.mxu0 %v158
    %190 = vmatpush.msra.mxu0 %v157
    %191 = vmatmul.f32.gmra.mxu0 %v174
    %v192 = vpop.f32.mrf.mxu0
    %v193 = vadd.f32 0.0, %v192
    %194 = vdwg.mxu0
    %v195 = vadd.f32 %v173, %v193
    %196 = vst [vmem:[#allocation2] sm:$0xff] %v195
    // Predicated region
    $region50: #{tpu_custom_call.1} parent=1 // pred_check
      %p197 = pneg %p88
    $region51: #{tpu_custom_call.1} parent=1 // pred_check_branch
      %199 = sbr.rel (%p197) target = $region53
    $region52: #{tpu_custom_call.1} parent=1 // pred_region
      %v200 = vld [vmem:[%s4] sm:$0x1]
      %v201 = vld [vmem:[%s5] sm:$0x1]
      %v202 = vld [vmem:[%s6] sm:$0x1]
      %v203 = vmul.f32 %v201, %v202
      %v204 = vadd.f32 %v200, %v203
      %v205 = vld [vmem:[#allocation2] sm:$0xff]
      %v207 = vperm.slane %v204, 0
      %v209 = vadd.f32 %v205, %v207
      %210 = vst [vmem:[#allocation11] sm:$0xff] %v209
    $region53: #{tpu_custom_call.1} parent=1 // pred_fallthru
      _
    // Predicated region
    $region54: #{tpu_custom_call.1} parent=1 // pred_check
      _
    $region55: #{tpu_custom_call.1} parent=1 // pred_check_branch
      %212 = sbr.rel (0) target = $region57
    $region56: #{tpu_custom_call.1} parent=1 // pred_region
      %214 = vsyncadd [#allocation5], 0
      %s216 = sshll.u32 [#allocation11], 4
      %s217 = int_to_ptr.vmem [resolvable:$true] %s216
      %s218 = sshll.u32 %s7, 4
      %s219 = int_to_ptr.hbm [resolvable:$true] %s218
      %221 = dma.vmem_to_hbm [thread:$0]  %s217, 128, %s219, [#allocation5]
    $region57: #{tpu_custom_call.1} parent=1 // pred_fallthru
      _
    // Predicated region
    $region58: #{tpu_custom_call.1} parent=1 // pred_check
      _
    $region59: #{tpu_custom_call.1} parent=1 // pred_check_branch
      %223 = sbr.rel (0) target = $region61
    $region60: #{tpu_custom_call.1} parent=1 // pred_region
      %225 = dma.done [#allocation5], 128
    $region61: #{tpu_custom_call.1} parent=1 // pred_fallthru
      _
    %226 = vsyncpa [#allocation4], 1
    %227 = vsyncpa [#allocation7], 1
    %228 = vsyncpa [#allocation10], 1
    %229 = vsyncpa [#allocation5], 1

</llo_original>
